<compile_context>
chip_gen: v7x
topology: tpu7x:2x2x1
jax: 0.10.0
libtpu: 0.0.40
codegen_flags: <defaults>
</compile_context>

<pallas_src>
import math

import jax
import jax.numpy as jnp
from jax.experimental import pallas as pl
from jax.experimental.pallas import tpu as pltpu


# ------------------------------- kernels -----------------------------------

def _quant_train_kernel(scal_ref, x_ref, o_ref):
    # scal_ref (SMEM via scalar prefetch): [clip_val, scale]
    clip_val = scal_ref[0]
    scale = scal_ref[1]
    x = x_ref[...].astype(jnp.float32)
    x = jnp.maximum(x, 0.0)                 # F.relu
    x = jnp.minimum(x, clip_val)            # torch.where(x < clip_val, x, clip_val)
    q = jnp.round(x / scale)                # linear_quantize, zero_point == 0
    o_ref[...] = (q * scale).astype(o_ref.dtype)


def _quant_eval_kernel(scal_ref, x_ref, o_ref):
    # scal_ref (SMEM): [round(clip_val / x_scale)]  (precomputed in the wrapper)
    x = x_ref[...]
    clip_q = scal_ref[0].astype(x.dtype)    # native-dtype math (bf16 stays bf16)
    x = jnp.maximum(x, 0.0)
    o_ref[...] = jnp.minimum(x, clip_q)


def _relu6_kernel(x_ref, o_ref):
    x = x_ref[...]                          # native-dtype math, no upcast
    o_ref[...] = jnp.clip(x, 0.0, 6.0)


# ------------------------------- plumbing -----------------------------------

def _choose_lane_width(total):
    """Pick a lane-dense width (multiple of 128). Returns (Lw, pad_elems)."""
    for lw in (4096, 2048, 1024, 512, 256, 128):
        if total % lw == 0:
            return lw, 0
    # TODO(synk): non-multiple-of-128 totals take one extra padded HBM copy.
    lw = 512
    padded = -(-total // lw) * lw
    return lw, padded - total


def _pick_row_tile(M, lw, itemsize, target_block_bytes):
    """Fixed large row tile (multiple of 8); grid uses cdiv + masked tail."""
    if M <= 8:
        return M                                    # block dim == full array dim
    tm = int(target_block_bytes // (lw * itemsize))
    tm = max(8, tm - (tm % 8))
    # Keep >= 2 grid steps for sizeable slabs so v7x megacore splits the work.
    if M * lw * itemsize > (2 << 20):
        half = ((-(-M // 2)) + 7) // 8 * 8
        tm = min(tm, max(8, half))
    tm = min(tm, (M // 8) * 8)                      # multiple of 8 that fits in M
    return max(8, tm)


def _pallas_elementwise(kernel, x, scalars=None, target_block_bytes=8 << 20):
    """Run an elementwise kernel over x viewed as a lane-dense 2D slab."""
    orig_shape = x.shape
    total = int(math.prod(orig_shape)) if orig_shape else 1
    itemsize = jnp.dtype(x.dtype).itemsize

    lw, pad = _choose_lane_width(total)
    x_flat = jnp.reshape(x, (-1,))
    if pad:
        x_flat = jnp.pad(x_flat, (0, pad))
    M = (total + pad) // lw
    x2d = x_flat.reshape(M, lw)

    tm = _pick_row_tile(M, lw, itemsize, target_block_bytes)
    grid = (pl.cdiv(M, tm),)
    block_bytes = tm * lw * itemsize
    # in + out double-buffered (~4x block bytes live) + headroom; cap keeps it
    # safe on v7x's 64 MiB physical VMEM and trivially safe on v5e/v6e.
    vmem_limit = int(min(48 << 20, max(16 << 20, 5 * block_bytes)))

    if scalars is not None:
        num_scalar_prefetch = 1
        block_spec = pl.BlockSpec((tm, lw), lambda i, s: (i, 0))
        args = (scalars, x2d)
    else:
        num_scalar_prefetch = 0
        block_spec = pl.BlockSpec((tm, lw), lambda i: (i, 0))
        args = (x2d,)

    out2d = pl.pallas_call(
        kernel,
        out_shape=jax.ShapeDtypeStruct((M, lw), x.dtype),
        grid_spec=pltpu.PrefetchScalarGridSpec(
            num_scalar_prefetch=num_scalar_prefetch,
            grid=grid,
            in_specs=[block_spec],
            out_specs=block_spec,
        ),
        compiler_params=pltpu.CompilerParams(
            dimension_semantics=("parallel",),
            vmem_limit_bytes=vmem_limit,
        ),
        cost_estimate=pl.CostEstimate(
            flops=5 * total,
            transcendentals=0,
            bytes_accessed=2 * total * itemsize,
        ),
    )(*args)

    out_flat = out2d.reshape(-1)
    if pad:
        out_flat = out_flat[:total]
    return out_flat.reshape(orig_shape)


def learned_clipped_linear_quant_forward(x, x_scale, quant_mode, *,
                                         num_bits=8, clip_val=6.0,
                                         training=True, eval_mode=False,
                                         target_block_bytes=8 << 20):
    """JAX/Pallas equivalent of LearnedClippedLinearQuantization.forward."""
    if not quant_mode:
        out = _pallas_elementwise(_relu6_kernel, x,
                                  target_block_bytes=target_block_bytes)
        return out, x_scale, num_bits

    scale = jnp.asarray(x_scale, jnp.float32).reshape(())
    clip = jnp.asarray(clip_val, jnp.float32).reshape(())

    if (not training) and eval_mode:
        # TODO(synk): the PyTorch eval path also does a host-side print(x_scale)
        # debug side effect; omitted here.
        clip_q = jnp.round(clip / scale)
        scalars = jnp.reshape(clip_q, (1,)).astype(jnp.float32)
        out = _pallas_elementwise(_quant_eval_kernel, x, scalars,
                                  target_block_bytes=target_block_bytes)
        return out, x_scale, num_bits

    # training / quant path
    scalars = jnp.stack([clip, scale]).astype(jnp.float32)
    out = _pallas_elementwise(_quant_train_kernel, x, scalars,
                              target_block_bytes=target_block_bytes)
    return out, x_scale, num_bits


# ------------------------------- reference ----------------------------------

def _reference_forward(x, x_scale, quant_mode, *, num_bits=8, clip_val=6.0,
                       training=True, eval_mode=False):
    if not quant_mode:
        return jnp.clip(x, 0.0, 6.0), x_scale, num_bits
    scale = jnp.asarray(x_scale, jnp.float32).reshape(())
    clip = jnp.asarray(clip_val, jnp.float32).reshape(())
    xr = jnp.maximum(x, 0.0)
    if (not training) and eval_mode:
        return jnp.minimum(xr, jnp.round(clip / scale)), x_scale, num_bits
    xr = jnp.minimum(xr, clip)
    q = jnp.round(xr / scale)
    return q * scale, x_scale, num_bits


# --------------------------------- demo --------------------------------------

if __name__ == "__main__":
    key = jax.random.PRNGKey(0)
    # NCHW activation (batch=2, channels=4, spatial 16x16), scaled so the
    # clip_val=6.0 branch is actually exercised.
    x = 4.0 * jax.random.normal(key, (2, 4, 16, 16), dtype=jnp.float32)
    x_scale = jnp.asarray(0.05, jnp.float32)
    num_bits = 8
    clip_val = 6.0

    # ---- training / quant path ----
    out, s_ret, bits = learned_clipped_linear_quant_forward(
        x, x_scale, quant_mode=True, num_bits=num_bits, clip_val=clip_val,
        training=True, eval_mode=False)
    out = jax.block_until_ready(out)
    ref, _, _ = _reference_forward(x, x_scale, True, num_bits=num_bits,
                                   clip_val=clip_val, training=True)
    s_f = float(x_scale)
    diff = jnp.abs(out - ref)
    assert out.shape == x.shape and bits == num_bits
    assert abs(float(jnp.asarray(s_ret)) - s_f) < 1e-7
    # Kernel divides by scale exactly like the reference; allow at most one
    # quant step of slack for any hardware divide/rounding difference.
    assert float(jnp.max(diff)) <= s_f + 1e-6
    assert float(jnp.mean(diff > 1e-5)) < 0.01

    # ---- quant_mode=False path (relu6) ----
    out6, _, _ = learned_clipped_linear_quant_forward(
        x, x_scale, quant_mode=False, num_bits=num_bits, clip_val=clip_val)
    out6 = jax.block_until_ready(out6)
    ref6, _, _ = _reference_forward(x, x_scale, False, num_bits=num_bits)
    assert bool(jnp.allclose(out6, ref6, atol=1e-6))

    # ---- eval path ----
    oute, _, _ = learned_clipped_linear_quant_forward(
        x, x_scale, quant_mode=True, num_bits=num_bits, clip_val=clip_val,
        training=False, eval_mode=True)
    oute = jax.block_until_ready(oute)
    refe, _, _ = _reference_forward(x, x_scale, True, num_bits=num_bits,
                                    clip_val=clip_val, training=False,
                                    eval_mode=True)
    assert bool(jnp.allclose(oute, refe, atol=1e-6))

    # ---- odd-sized tensor (exercises lane-padding + cdiv tail path) ----
    x_odd = 4.0 * jax.random.normal(jax.random.PRNGKey(1), (2, 4, 7, 7),
                                    dtype=jnp.float32)
    out_odd, _, _ = learned_clipped_linear_quant_forward(
        x_odd, x_scale, quant_mode=True, num_bits=num_bits, clip_val=clip_val,
        training=True, eval_mode=False)
    out_odd = jax.block_until_ready(out_odd)
    ref_odd, _, _ = _reference_forward(x_odd, x_scale, True, num_bits=num_bits,
                                       clip_val=clip_val, training=True)
    assert float(jnp.max(jnp.abs(out_odd - ref_odd))) <= s_f + 1e-6

    print("KERNEL_OK")
</pallas_src>

<mosaic_0001>
module attributes {stable_mosaic.version = 11 : i64} {
  func.func @_quant_train_kernel(%arg0: i32, %arg1: memref<2xf32, #tpu.memory_space<smem>>, %arg2: memref<1x2048xf32, #tpu.memory_space<vmem>>, %arg3: memref<1x2048xf32, #tpu.memory_space<vmem>>) attributes {dimension_semantics = [#tpu.dimension_semantics<parallel>], iteration_bounds = array<i64: 1>, scalar_prefetch = 1 : i64, scratch_operands = 0 : i64, tpu.core_type = #tpu.core_type<tc>, window_params = [{transform_indices = @transform_0, window_bounds = array<i64: 1, 2048>}, {transform_indices = @transform_1, window_bounds = array<i64: 1, 2048>}]} {
    %c0 = arith.constant 0 : index
    %0 = memref.load %arg1[%c0] : memref<2xf32, #tpu.memory_space<smem>>
    %c1 = arith.constant 1 : index
    %1 = memref.load %arg1[%c1] : memref<2xf32, #tpu.memory_space<smem>>
    %c0_0 = arith.constant 0 : index
    %c0_1 = arith.constant 0 : index
    %2 = vector.load %arg2[%c0_0, %c0_1] : memref<1x2048xf32, #tpu.memory_space<vmem>>, vector<1x2048xf32>
    %cst = arith.constant 0.000000e+00 : f32
    %3 = vector.broadcast %cst : f32 to vector<1x2048xf32>
    %4 = arith.maximumf %2, %3 : vector<1x2048xf32>
    %5 = vector.broadcast %0 : f32 to vector<1x2048xf32>
    %6 = arith.minimumf %4, %5 : vector<1x2048xf32>
    %7 = vector.broadcast %1 : f32 to vector<1x2048xf32>
    %8 = arith.divf %6, %7 : vector<1x2048xf32>
    %9 = math.roundeven %8 : vector<1x2048xf32>
    %10 = vector.broadcast %1 : f32 to vector<1x2048xf32>
    %11 = arith.mulf %9, %10 : vector<1x2048xf32>
    %c0_2 = arith.constant 0 : index
    %c0_3 = arith.constant 0 : index
    %12 = vector.load %arg3[%c0_2, %c0_3] : memref<1x2048xf32, #tpu.memory_space<vmem>>, vector<1x2048xf32>
    tpu.vector_store %arg3[%c0_2, %c0_3], %11 {strides = array<i32>} : memref<1x2048xf32, #tpu.memory_space<vmem>>, vector<1x2048xf32>,
    return
  }
  func.func @transform_0(%arg0: i32, %arg1: memref<2xf32, #tpu.memory_space<smem>>) -> (i32, i32) {
    %c0_i32 = arith.constant 0 : i32
    %c0_i32_0 = arith.constant 0 : i32
    return %arg0, %c0_i32 : i32, i32
  }
  func.func @transform_1(%arg0: i32, %arg1: memref<2xf32, #tpu.memory_space<smem>>) -> (i32, i32) {
    %c0_i32 = arith.constant 0 : i32
    %c0_i32_0 = arith.constant 0 : i32
    return %arg0, %c0_i32 : i32, i32
  }
}

</mosaic_0001>

<llo_original>
// kernel: tpu_custom_call.1
$region0: #{tpu_custom_call.1}
  #allocation0 [shape = 'u32[]', space=smem, size = 0x4, offset = 0x4, fixed_abs, tag = 'smem constant byte address 0x4 - core index']
  #allocation1 [shape = 'u32[144,128]{1,0:T(1,128)}', space=vmem, size = 0x12000, scoped, tag = 'internal scratch']
  #allocation2 [shape = 's32[1]{0}', space=sflag, size = 0x4, scoped, tag = 'scoped memory for tpu_custom_call.1']
  #allocation3 [shape = 'u8[512]{0}', space=smem, size = 0x200, scoped, tag = 'prefetched SMEM operand 0']
  %s0 = inlined_call_operand.hbm [shape: f32[2], index: 0, kind: input, shape index: {}]
  %s1 = inlined_call_operand.hbm [shape: f32[1,2048], index: 1, kind: input, shape index: {}]
  %s2 = inlined_call_operand.hbm [shape: f32[1,2048], index: 2, kind: output, shape index: {}]
  %s3 = sld [smem:[#allocation0]]
  $region18: #{tpu_custom_call.1} parent=0
    _
  %s5 = ssub.s32 1, %s3
  %s6 = scalar_select 0, %s5, %s3
  %8 = dma.hbm_to_smem %s0, 16, [#allocation3], [#allocation2]
  %9 = dma.done [#allocation2], 16
  %10 = sfence
  $region1: #{tpu_custom_call.1} parent=0
    #allocation4 [shape = 'u8[8192]{0}', space=vmem, size = 0x2000, scoped, tag = 'input window, operand 1, single buffered']
    #allocation5 [shape = 's32[1]{0}', space=sflag, size = 0x4, scoped, tag = 'scoped memory for tpu_custom_call.1']
    #allocation6 [shape = 's32[1]{0}', space=sflag, size = 0x4, scoped, tag = 'scoped memory for tpu_custom_call.1']
    #allocation7 [shape = 'u8[8192]{0}', space=vmem, size = 0x2000, scoped, tag = 'output window, operand 0, single buffered']
    %11 = vsyncpa [#allocation5], 0
    %12 = vsyncpa [#allocation6], 0
    // Predicated region
    $region2: #{tpu_custom_call.1} parent=1 // pred_check
      _
    $region3: #{tpu_custom_call.1} parent=1 // pred_check_branch
      %14 = sbr.rel (0) target = $region5
    $region4: #{tpu_custom_call.1} parent=1 // pred_region
      %s16 = ssub.s32 256, 256
      %17 = vsyncadd [#allocation5], %s16
      %s19 = sshll.u32 [#allocation4], 4
      %s20 = int_to_ptr.vmem [resolvable:$true] %s19
      %22 = dma.hbm_to_vmem [thread:$0]  %s1, 256, %s20, [#allocation5]
    $region5: #{tpu_custom_call.1} parent=1 // pred_fallthru
      _
    // Predicated region
    $region6: #{tpu_custom_call.1} parent=1 // pred_check
      _
    $region7: #{tpu_custom_call.1} parent=1 // pred_check_branch
      %24 = sbr.rel (0) target = $region9
    $region8: #{tpu_custom_call.1} parent=1 // pred_region
      %25 = dma.done [#allocation5], 256
    $region9: #{tpu_custom_call.1} parent=1 // pred_fallthru
      _
    %s26 = sld [smem:[#allocation3]]
    %s27 = sld [smem:[#allocation3 + $0x1]]
    %v28 = vld [vmem:[#allocation4] sm:$0xff]
    %v29 = vld [vmem:[#allocation4 + $0x8] sm:$0xff]
    %v30 = vmax.f32 %v28, 0.0
    %v31 = vmax.f32 %v29, 0.0
    %v32 = vstv %s26
    %v33 = vmin.f32 %v30, %v32
    %v34 = vmin.f32 %v31, %v32
    %v35 = vstv %s27
    %v36 = vrcp.pop %v35
    %v37 = vmul.f32 %v33, %v36
    %v38 = vmul.f32 %v34, %v36
    %v39 = vround.ne.pseudo %v37
    %v40 = vround.ne.pseudo %v38
    %v41 = vmul.f32 %v39, %v35
    %v42 = vmul.f32 %v40, %v35
    %43 = vst [vmem:[#allocation7] sm:$0xff] %v41
    %44 = vst [vmem:[#allocation7 + $0x8] sm:$0xff] %v42
    // Predicated region
    $region10: #{tpu_custom_call.1} parent=1 // pred_check
      _
    $region11: #{tpu_custom_call.1} parent=1 // pred_check_branch
      %46 = sbr.rel (0) target = $region13
    $region12: #{tpu_custom_call.1} parent=1 // pred_region
      %s48 = ssub.s32 256, 256
      %49 = vsyncadd [#allocation6], %s48
      %s51 = sshll.u32 [#allocation7], 4
      %s52 = int_to_ptr.vmem [resolvable:$true] %s51
      %54 = dma.vmem_to_hbm [thread:$0]  %s52, 256, %s2, [#allocation6]
    $region13: #{tpu_custom_call.1} parent=1 // pred_fallthru
      _
    // Predicated region
    $region14: #{tpu_custom_call.1} parent=1 // pred_check
      _
    $region15: #{tpu_custom_call.1} parent=1 // pred_check_branch
      %56 = sbr.rel (0) target = $region17
    $region16: #{tpu_custom_call.1} parent=1 // pred_region
      %57 = dma.done [#allocation6], 256
    $region17: #{tpu_custom_call.1} parent=1 // pred_fallthru
      _
    %58 = vsyncpa [#allocation5], 1
    %59 = vsyncpa [#allocation6], 1

</llo_original>
